<compile_context>
chip_gen: v7x
topology: tpu7x:2x2x1
jax: 0.10.0
libtpu: 0.0.40
codegen_flags: <defaults>
</compile_context>

<pallas_src>
import math
from functools import partial

import jax
import jax.numpy as jnp
from jax.experimental import pallas as pl
from jax.experimental.pallas import tpu as pltpu


# ------------------------------- kernel body --------------------------------


def _layer_scale_kernel(x_ref, s_ref, o_ref):
    """o = x * s, with a per-row (i.e. per-channel) scale broadcast across the lane axis.

    s_ref is either a per-tile (tm, 1) block or the full (M_pad, 1) scale resident in VMEM
    (constant index_map); in the resident case slice out this tile's rows.
    """
    tm = x_ref.shape[0]
    if s_ref.shape[0] == tm:          # per-tile scale block (streaming fallback)
        s = s_ref[...]
    else:                             # full scale resident in VMEM
        row0 = pl.multiple_of(pl.program_id(0) * tm, tm)
        s = s_ref[pl.ds(row0, tm), :]
    # Multiply in the promoted dtype (f32 scale) and cast on the store: slightly more
    # accurate than pre-casting the scale when x is bf16 (mirrors torch's f32 parameter).
    o_ref[...] = (x_ref[...] * s).astype(o_ref.dtype)


# ------------------------------ tiling helpers ------------------------------


def _round_up(a: int, b: int) -> int:
    return ((a + b - 1) // b) * b


def _device_params():
    """(per-block byte budget, two TensorCores per chip?) for the local TPU generation."""
    try:
        kind = jax.devices()[0].device_kind.lower()
    except Exception:
        kind = ""
    if "v7" in kind:
        # 3.2 TB/s HBM: bigger blocks amortize the ~0.35us/step overhead; 64 MiB VMEM/TC.
        return 8 << 20, True
    if "v6" in kind or "trillium" in kind:
        return 4 << 20, False
    # v5e & older / unknown: 16 MiB scoped-VMEM default, lower HBM BW -> smaller blocks.
    return 3 << 20, False


def _pick_tiling(M, L, itemsize, budget_bytes, two_cores):
    """Row-tile size + grid count.  O(1) arithmetic, dtype-aware sublane multiple."""
    sub = {4: 8, 2: 16, 1: 32}.get(itemsize, 8)   # f32 / bf16 / int8+fp8 sublane packing
    if M <= sub:
        return M, 1                               # tiny input: one full-rows block
    row_bytes = max(1, L * itemsize)
    # Minimum #blocks so each block stays under budget; >= 2 so DMA/compute overlap.
    n_blocks = max(2, pl.cdiv(M * row_bytes, budget_bytes))
    if two_cores and n_blocks % 2:
        n_blocks += 1                             # even split across v7x's two TensorCores
    tm = _round_up(pl.cdiv(M, n_blocks), sub)
    tm = min(tm, _round_up(M, sub))
    return tm, pl.cdiv(M, tm)


# --------------------------------- wrapper ----------------------------------


def _layer_scale_impl(x, weight, *, inplace=False):
    """LayerScale forward: x * weight.view(-1, 1, 1), x of shape (..., C, H, W)."""
    C = weight.shape[0]
    assert x.ndim >= 3 and x.shape[-3] == C, "expected x of shape (..., C, H, W)"
    H, W = x.shape[-2], x.shape[-1]
    lead = math.prod(x.shape[:-3]) if x.ndim > 3 else 1

    M = lead * C                 # rows: one per (leading, channel) pair -> constant scale/row
    L = H * W                    # lanes: contiguous spatial extent of one channel
    # NOTE: when H*W % 128 != 0 the trailing lane vreg of each store is masked (vst.msk);
    # still correct, just below peak store BW.
    # TODO(synk): pad/re-flatten L for lane density if non-128-multiple spatial shapes get hot.

    itemsize = jnp.dtype(x.dtype).itemsize
    budget, two_cores = _device_params()
    tm, grid = _pick_tiling(M, L, itemsize, budget, two_cores)
    M_pad = tm * grid            # grid covers [0, M_pad); last block's OOB rows are masked

    x2 = x.reshape(M, L)
    # Per-row scale (row (b, c) -> weight[c]); f32 for accuracy, padded to the grid extent.
    scale = jnp.broadcast_to(weight.astype(jnp.float32)[None, :], (lead, C)).reshape(M, 1)
    if M_pad > M:
        scale = jnp.pad(scale, ((0, M_pad - M), (0, 0)))

    # The scale is tiny: keep it fully resident in VMEM (constant index_map -> fetched once).
    # Fall back to per-tile streaming only if it is unexpectedly large.
    scale_bytes = M_pad * 4
    if scale_bytes <= (1 << 20):
        s_spec = pl.BlockSpec((M_pad, 1), lambda i: (0, 0))
    else:
        s_spec = pl.BlockSpec((tm, 1), lambda i: (i, 0))

    block_bytes = tm * L * itemsize
    # 2x double-buffered input blocks + 2x output blocks + scale + margin.
    vmem_limit = int(min(4 * block_bytes + 2 * scale_bytes + (2 << 20), 56 << 20))

    out2 = pl.pallas_call(
        _layer_scale_kernel,
        out_shape=jax.ShapeDtypeStruct((M, L), x.dtype),
        grid=(grid,),
        in_specs=[
            pl.BlockSpec((tm, L), lambda i: (i, 0)),
            s_spec,
        ],
        out_specs=pl.BlockSpec((tm, L), lambda i: (i, 0)),
        input_output_aliases=({0: 0} if inplace else {}),
        cost_estimate=pl.CostEstimate(
            flops=M * L,
            transcendentals=0,
            bytes_accessed=2 * M * L * itemsize + scale_bytes,
        ),
        compiler_params=pltpu.CompilerParams(
            dimension_semantics=("parallel",),
            vmem_limit_bytes=vmem_limit,
        ),
    )(x2, scale)
    return out2.reshape(x.shape)


# Public entry points (jitted).  The inplace flavor mirrors torch's x.mul_(): the caller must
# donate x (its HBM buffer is aliased onto the output and must not be reused afterwards).
layer_scale = jax.jit(partial(_layer_scale_impl, inplace=False))
layer_scale_inplace = jax.jit(partial(_layer_scale_impl, inplace=True), donate_argnums=0)


# --------------------------------- driver -----------------------------------


if __name__ == "__main__":
    # Small NCHW-style input consistent with the module: per-channel scale over (H, W).
    B, C, H, W = 2, 32, 16, 16

    key = jax.random.PRNGKey(0)
    kx, kw = jax.random.split(key)
    x = jax.random.normal(kx, (B, C, H, W), jnp.float32)
    # Module init is init_values * ones(dim); perturb per-channel so the broadcast is exercised.
    weight = 1e-5 * jnp.ones((C,), jnp.float32) + 0.1 * jax.random.normal(kw, (C,), jnp.float32)

    ref = x * weight[None, :, None, None]

    out = jax.block_until_ready(layer_scale(x, weight))
    assert out.shape == x.shape
    assert bool(jnp.all(jnp.isfinite(out)))
    assert bool(jnp.allclose(out, ref, rtol=1e-6, atol=1e-6)), "Pallas result mismatches reference"

    # inplace=True flavor: donate a fresh copy of x so its buffer can be reused by the output.
    x_donate = x + 0.0
    out_inplace = jax.block_until_ready(layer_scale_inplace(x_donate, weight))
    assert bool(jnp.allclose(out_inplace, ref, rtol=1e-6, atol=1e-6))

    print("KERNEL_OK")
</pallas_src>

<mosaic_0001>
module attributes {stable_mosaic.version = 11 : i64} {
  func.func @_layer_scale_kernel(%arg0: i32, %arg1: memref<32x256xf32, #tpu.memory_space<vmem>>, %arg2: memref<64x1xf32, #tpu.memory_space<vmem>>, %arg3: memref<32x256xf32, #tpu.memory_space<vmem>>) attributes {dimension_semantics = [#tpu.dimension_semantics<parallel>], iteration_bounds = array<i64: 2>, scalar_prefetch = 0 : i64, scratch_operands = 0 : i64, tpu.core_type = #tpu.core_type<tc>, window_params = [{transform_indices = @transform_0, window_bounds = array<i64: 32, 256>}, {pipeline_mode = #tpu.pipeline_mode<synchronous>, transform_indices = @transform_1, window_bounds = array<i64: 64, 1>}, {transform_indices = @transform_2, window_bounds = array<i64: 32, 256>}]} {
    %c32_i32 = arith.constant 32 : i32
    %0 = arith.muli %arg0, %c32_i32 : i32
    %1 = tpu.assume_multiple %0, 32 : i32
    %2 = arith.index_cast %1 : i32 to index
    %c0 = arith.constant 0 : index
    %3 = vector.load %arg2[%2, %c0] : memref<64x1xf32, #tpu.memory_space<vmem>>, vector<32x1xf32>
    %c0_0 = arith.constant 0 : index
    %c0_1 = arith.constant 0 : index
    %4 = vector.load %arg1[%c0_0, %c0_1] : memref<32x256xf32, #tpu.memory_space<vmem>>, vector<32x256xf32>
    %5 = vector.broadcast %3 : vector<32x1xf32> to vector<32x256xf32>
    %6 = arith.mulf %4, %5 : vector<32x256xf32>
    %c0_2 = arith.constant 0 : index
    %c0_3 = arith.constant 0 : index
    %7 = vector.load %arg3[%c0_2, %c0_3] : memref<32x256xf32, #tpu.memory_space<vmem>>, vector<32x256xf32>
    tpu.vector_store %arg3[%c0_2, %c0_3], %6 {strides = array<i32>} : memref<32x256xf32, #tpu.memory_space<vmem>>, vector<32x256xf32>,
    return
  }
  func.func @transform_0(%arg0: i32) -> (i32, i32) {
    %c0_i32 = arith.constant 0 : i32
    %c0_i32_0 = arith.constant 0 : i32
    return %arg0, %c0_i32 : i32, i32
  }
  func.func @transform_1(%arg0: i32) -> (i32, i32) {
    %c0_i32 = arith.constant 0 : i32
    %c0_i32_0 = arith.constant 0 : i32
    %c0_i32_1 = arith.constant 0 : i32
    return %c0_i32, %c0_i32_0 : i32, i32
  }
  func.func @transform_2(%arg0: i32) -> (i32, i32) {
    %c0_i32 = arith.constant 0 : i32
    %c0_i32_0 = arith.constant 0 : i32
    return %arg0, %c0_i32 : i32, i32
  }
}

</mosaic_0001>

<llo_original>
// kernel: _layer_scale_impl.1
$region0: #{_layer_scale_impl.1}
  #allocation0 [shape = 'u32[]', space=smem, size = 0x4, offset = 0x4, fixed_abs, tag = 'smem constant byte address 0x4 - core index']
  #allocation1 [shape = 'u32[144,128]{1,0:T(1,128)}', space=vmem, size = 0x12000, scoped, tag = 'internal scratch']
  %s0 = inlined_call_operand.vmem [shape: f32[64,256], index: 0, kind: input, shape index: {}]
  %s1 = inlined_call_operand.vmem [shape: f32[64,1], index: 1, kind: input, shape index: {}]
  %s2 = inlined_call_operand.vmem [shape: f32[64,256], index: 2, kind: output, shape index: {}]
  %s3 = sld [smem:[#allocation0]]
  $region41: #{_layer_scale_impl.1} parent=0
    _
  %s5 = ssub.s32 1, %s3
  %s6 = scalar_select 0, %s5, %s3
  loop: start=0, step=1, limit=4
  $region2: #{_layer_scale_impl.1} parent=0 // loop_pre_header
    _
  $region3: #{_layer_scale_impl.1} parent=0 // loop_header
    %s8 = sphi 0, %s12
    %p9 = scmp.ge.s32.totalorder %s8, 4
    %s18 = sphi 0, %s20
    %s21 = sphi 0, %s18
    %s22 = sphi 0, %s21
    %s38 = sphi 0, %s22
    %s42 = sphi 0, %s42
    %s44 = sphi 0, %s42
    %s45 = sphi 0, %s44
    %s59 = sphi 0, %s45
    %s65 = sphi 0, %s67
    %s68 = sphi 0, %s65
    %s69 = sphi 0, %s68
    %s85 = sphi 0, %s69
  $region4: #{_layer_scale_impl.1} parent=0 // loop_header_branch
    %11 = sbr.rel (%p9) target = $region8
  $region5: #{_layer_scale_impl.1} parent=0 // loop_body
    %s13 = ssub.s32 %s8, 1
    %s14 = ssub.s32 %s8, 2
    %s15 = sadd.s32 %s8, 1
    %s16 = ssub.s32 %s8, %s15
    %p17 = scmp.eq.s32.totalorder %s16, 0
    %s19 = sadd.s32 %s18, 1
    %s20 = scalar_select %p17, %s18, %s19
    %p23 = pneg %p17
    %p24 = scmp.eq.s32.totalorder %s8, 1
    %p25 = por %p23, %p24
    %p26 = scmp.ne.s32.totalorder %s18, %s21
    %p27 = scmp.eq.s32.totalorder %s8, 0
    %p28 = por %p26, %p27
    %p29 = scmp.ne.s32.totalorder %s18, %s21
    %p30 = scmp.eq.s32.totalorder %s13, 1
    %p31 = por %p29, %p30
    %p32 = scmp.ne.s32.totalorder %s21, %s22
    %p33 = scmp.eq.s32.totalorder %s13, 0
    %p34 = por %p32, %p33
    %p35 = scmp.ne.s32.totalorder %s21, %s22
    %p36 = scmp.eq.s32.totalorder %s14, 1
    %p37 = por %p35, %p36
    %p39 = scmp.ne.s32.totalorder %s22, %s38
    %p40 = scmp.eq.s32.totalorder %s14, 0
    %p41 = por %p39, %p40
    %s43 = sadd.s32 %s42, 1
    %p46 = scmp.eq.s32.totalorder %s8, 1
    %p47 = scmp.ne.s32.totalorder %s42, %s44
    %p48 = scmp.eq.s32.totalorder %s8, 0
    %p49 = por %p47, %p48
    %p50 = scmp.ne.s32.totalorder %s42, %s44
    %p51 = scmp.eq.s32.totalorder %s13, 1
    %p52 = por %p50, %p51
    %p53 = scmp.ne.s32.totalorder %s44, %s45
    %p54 = scmp.eq.s32.totalorder %s13, 0
    %p55 = por %p53, %p54
    %p56 = scmp.ne.s32.totalorder %s44, %s45
    %p57 = scmp.eq.s32.totalorder %s14, 1
    %p58 = por %p56, %p57
    %p60 = scmp.ne.s32.totalorder %s45, %s59
    %p61 = scmp.eq.s32.totalorder %s14, 0
    %p62 = por %p60, %p61
    %s63 = ssub.s32 %s8, %s15
    %p64 = scmp.eq.s32.totalorder %s63, 0
    %s66 = sadd.s32 %s65, 1
    %s67 = scalar_select %p64, %s65, %s66
    %p70 = pneg %p64
    %p71 = scmp.eq.s32.totalorder %s8, 1
    %p72 = por %p70, %p71
    %p73 = scmp.ne.s32.totalorder %s65, %s68
    %p74 = scmp.eq.s32.totalorder %s8, 0
    %p75 = por %p73, %p74
    %p76 = scmp.ne.s32.totalorder %s65, %s68
    %p77 = scmp.eq.s32.totalorder %s13, 1
    %p78 = por %p76, %p77
    %p79 = scmp.ne.s32.totalorder %s68, %s69
    %p80 = scmp.eq.s32.totalorder %s13, 0
    %p81 = por %p79, %p80
    %p82 = scmp.ne.s32.totalorder %s68, %s69
    %p83 = scmp.eq.s32.totalorder %s14, 1
    %p84 = por %p82, %p83
    %p86 = scmp.ne.s32.totalorder %s69, %s85
    %p87 = scmp.eq.s32.totalorder %s14, 0
    %p88 = por %p86, %p87
    %p89 = scmp.le.s32.totalorder 1, %s8
    %p90 = scmp.lt.s32.totalorder %s8, 3
    %p91 = pnand %p89, %p90
    %p92 = pneg %p91
    // Predicated region
    $region9: #{_layer_scale_impl.1} parent=5 // pred_check
      _
    $region10: #{_layer_scale_impl.1} parent=5 // pred_check_branch
      %94 = sbr.rel (%p91) target = $region12
    $region11: #{_layer_scale_impl.1} parent=5 // pred_region
      %s95 = ssub.s32 %s8, 1
      // Predicated region
      $region13: #{_layer_scale_impl.1} parent=11 // pred_check
        %p96 = pneg %p55
      $region14: #{_layer_scale_impl.1} parent=11 // pred_check_branch
        %98 = sbr.rel (%p96) target = $region16
      $region15: #{_layer_scale_impl.1} parent=11 // pred_region
        _
      $region16: #{_layer_scale_impl.1} parent=11 // pred_fallthru
        _
    $region12: #{_layer_scale_impl.1} parent=5 // pred_fallthru
      _
    %p99 = scmp.lt.s32.totalorder %s8, 2
    // Predicated region
    $region17: #{_layer_scale_impl.1} parent=5 // pred_check
      %p100 = pneg %p99
    $region18: #{_layer_scale_impl.1} parent=5 // pred_check_branch
      %102 = sbr.rel (%p100) target = $region20
    $region19: #{_layer_scale_impl.1} parent=5 // pred_region
      // Predicated region
      $region21: #{_layer_scale_impl.1} parent=19 // pred_check
        %p103 = pneg %p28
      $region22: #{_layer_scale_impl.1} parent=19 // pred_check_branch
        %105 = sbr.rel (%p103) target = $region24
      $region23: #{_layer_scale_impl.1} parent=19 // pred_region
        %s106 = smul.u32 4, %s8
        %p107 = scmp.lt.s32.totalorder %s106, 7
        %s108 = scalar_select %p107, %s106, 7
        %s109 = smul.addr %s108, 2
        %s110 = smul.addr %s109, 8
        %s111 = scalar_lea.vmem %s0, %s110
        %s112 = smul.u32 4, %s8
      $region24: #{_layer_scale_impl.1} parent=19 // pred_fallthru
        _
    $region20: #{_layer_scale_impl.1} parent=5 // pred_fallthru
      _
    %p113 = scmp.le.s32.totalorder 1, %s8
    %p114 = scmp.lt.s32.totalorder %s8, 3
    %p115 = pnand %p113, %p114
    %p116 = pneg %p115
    // Predicated region
    $region25: #{_layer_scale_impl.1} parent=5 // pred_check
      _
    $region26: #{_layer_scale_impl.1} parent=5 // pred_check_branch
      %118 = sbr.rel (%p115) target = $region28
    $region27: #{_layer_scale_impl.1} parent=5 // pred_region
      %s119 = ssub.s32 %s8, 1
      %s120 = smul.u32 4, %s13
      %p121 = scmp.lt.s32.totalorder %s120, 7
      %s122 = scalar_select %p121, %s120, 7
      %s123 = smul.addr %s122, 2
      %s124 = smul.addr %s123, 8
      %s125 = scalar_lea.vmem %s0, %s124
      %p126 = pneg %p34
      %p127 = pneg %p31
      %p128 = pneg %p55
      %p129 = pneg %p52
      %p130 = pneg %p81
      %p131 = pneg %p78
      %s132 = smul.u32 4, %s13
      %p133 = scmp.lt.s32.totalorder %s132, 7
      %s134 = scalar_select %p133, %s132, 7
      %s135 = smul.addr %s134, 2
      %s136 = smul.addr %s135, 8
      %s137 = scalar_lea.vmem %s2, %s136
      %s138 = smul.u32 4, %s13
      %p139 = scmp.lt.s32.totalorder %s138, 7
      %s140 = scalar_select %p139, %s138, 7
      %s141 = smul.addr %s140, 2
      %s142 = smul.addr %s141, 8
      %s143 = scalar_lea.vmem %s0, %s142
      %s144 = smul.u32 4, %s13
      %s145 = smul.u32 4, %s13
      %p146 = scmp.lt.s32.totalorder %s145, 7
      %s147 = scalar_select %p146, %s145, 7
      %s148 = smul.addr %s147, 2
      %s149 = smul.addr %s148, 8
      %s150 = scalar_lea.vmem %s2, %s149
      %s151 = smul.u32 4, %s13
      %s152 = smul.u32 %s13, 32
      %s153 = scalar_lea.vmem %s1, %s152
      %v154 = vld [vmem:[%s153] sm:$0xff]
      %v155 = vld [vmem:[%s153 + $0x8] sm:$0xff]
      %v156 = vld [vmem:[%s153 + $0x10] sm:$0xff]
      %v157 = vld [vmem:[%s153 + $0x18] sm:$0xff]
      %v158 = vld [vmem:[%s143] sm:$0xff]
      %v159 = vld [vmem:[%s143 + $0x8] sm:$0xff]
      %v160 = vld [vmem:[%s143 + $0x10] sm:$0xff]
      %v161 = vld [vmem:[%s143 + $0x18] sm:$0xff]
      %v162 = vld [vmem:[%s143 + $0x20] sm:$0xff]
      %v163 = vld [vmem:[%s143 + $0x28] sm:$0xff]
      %v164 = vld [vmem:[%s143 + $0x30] sm:$0xff]
      %v165 = vld [vmem:[%s143 + $0x38] sm:$0xff]
      %167 = vset.pattern.permute.xlu0 0
      %168 = vperm.xlu0 %167, %v154
      %v169 = vpop.permute.xlu0 %168
      %172 = vset.pattern.permute.xlu0 0
      %173 = vperm.xlu0 %172, %v155
      %v174 = vpop.permute.xlu0 %173
      %177 = vset.pattern.permute.xlu0 0
      %178 = vperm.xlu0 %177, %v156
      %v179 = vpop.permute.xlu0 %178
      %182 = vset.pattern.permute.xlu0 0
      %183 = vperm.xlu0 %182, %v157
      %v184 = vpop.permute.xlu0 %183
      %v186 = vmul.f32 %v158, %v169
      %v187 = vmul.f32 %v159, %v169
      %v188 = vmul.f32 %v160, %v174
      %v189 = vmul.f32 %v161, %v174
      %v190 = vmul.f32 %v162, %v179
      %v191 = vmul.f32 %v163, %v179
      %v192 = vmul.f32 %v164, %v184
      %v193 = vmul.f32 %v165, %v184
      %194 = vst [vmem:[%s150] sm:$0xff] %v186
      %195 = vst [vmem:[%s150 + $0x8] sm:$0xff] %v187
      %196 = vst [vmem:[%s150 + $0x10] sm:$0xff] %v188
      %197 = vst [vmem:[%s150 + $0x18] sm:$0xff] %v189
      %198 = vst [vmem:[%s150 + $0x20] sm:$0xff] %v190
      %199 = vst [vmem:[%s150 + $0x28] sm:$0xff] %v191
      %200 = vst [vmem:[%s150 + $0x30] sm:$0xff] %v192
      %201 = vst [vmem:[%s150 + $0x38] sm:$0xff] %v193
      %s202 = smul.u32 4, %s13
      %p203 = scmp.lt.s32.totalorder %s202, 7
      %s204 = scalar_select %p203, %s202, 7
      %s205 = smul.addr %s204, 2
      %s206 = smul.addr %s205, 8
      %s207 = scalar_lea.vmem %s2, %s206
      // Predicated region
      $region29: #{_layer_scale_impl.1} parent=27 // pred_check
        %p208 = pneg %p78
      $region30: #{_layer_scale_impl.1} parent=27 // pred_check_branch
        %210 = sbr.rel (%p208) target = $region32
      $region31: #{_layer_scale_impl.1} parent=27 // pred_region
        %s211 = smul.u32 4, %s13
      $region32: #{_layer_scale_impl.1} parent=27 // pred_fallthru
        _
    $region28: #{_layer_scale_impl.1} parent=5 // pred_fallthru
      _
    %p212 = scmp.le.s32.totalorder 2, %s8
    // Predicated region
    $region33: #{_layer_scale_impl.1} parent=5 // pred_check
      %p213 = pneg %p212
    $region34: #{_layer_scale_impl.1} parent=5 // pred_check_branch
      %215 = sbr.rel (%p213) target = $region36
    $region35: #{_layer_scale_impl.1} parent=5 // pred_region
      %s216 = ssub.s32 %s8, 2
      // Predicated region
      $region37: #{_layer_scale_impl.1} parent=35 // pred_check
        %p217 = pneg %p84
      $region38: #{_layer_scale_impl.1} parent=35 // pred_check_branch
        %219 = sbr.rel (%p217) target = $region40
      $region39: #{_layer_scale_impl.1} parent=35 // pred_region
        %s220 = smul.u32 4, %s14
        %p221 = scmp.lt.s32.totalorder %s220, 7
        %s222 = scalar_select %p221, %s220, 7
        %s223 = smul.addr %s222, 2
        %s224 = smul.addr %s223, 8
        %s225 = scalar_lea.vmem %s2, %s224
      $region40: #{_layer_scale_impl.1} parent=35 // pred_fallthru
        _
    $region36: #{_layer_scale_impl.1} parent=5 // pred_fallthru
      _
  $region6: #{_layer_scale_impl.1} parent=0 // loop_footer
    %s12 = sadd.s32 1, %s8
  $region7: #{_layer_scale_impl.1} parent=0 // loop_footer_branch
    %7 = sbr.rel target = $region3
  $region8: #{_layer_scale_impl.1} parent=0 // loop_exit
    _

</llo_original>
